<compile_context>
chip_gen: v5e
topology: v5e:2x2
jax: 0.10.0
libtpu: 0.0.40
codegen_flags: <defaults>
</compile_context>

<pallas_src>
import functools
import math

import jax
import jax.numpy as jnp
from jax import lax
from jax.experimental import pallas as pl
from jax.experimental.pallas import tpu as pltpu

GAMMA = 1.5
ALPHA = 0.25
LANES = 128
APPROX_RECIPROCAL = False  # set True for the v7x approx-vrcp micro-optimization


def _qfocal_sum_kernel(pred_ref, true_ref, out_ref, acc_ref, *,
                       gamma, alpha, steps, num_blocks, rows_per_block,
                       last_block_rows, acc_rows, has_phantom):
    p = pl.program_id(0)   # partition (parallel) axis
    j = pl.program_id(1)   # reduction (arbitrary) axis

    @pl.when(j == 0)
    def _():
        acc_ref[...] = jnp.zeros_like(acc_ref)

    x = pred_ref[...].astype(jnp.float32)
    y = true_ref[...].astype(jnp.float32)

    # exp(-|x|) is shared between the stable BCE log term and the sigmoid.
    e = jnp.exp(-jnp.abs(x))

    # BCEWithLogitsLoss (reduction='none'), numerically stable:
    #   max(x, 0) - x*y + log(1 + exp(-|x|))
    bce = jnp.maximum(x, 0.0) - x * y + jnp.log1p(e)

    # sigmoid(x) via the shared exp:  x>=0 -> 1/(1+e);  x<0 -> e/(1+e)
    one_plus_e = 1.0 + e
    if APPROX_RECIPROCAL:
        r = pl.reciprocal(one_plus_e, approx=True)
    else:
        r = 1.0 / one_plus_e
    pred_prob = jnp.where(x >= 0.0, r, e * r)

    alpha_factor = y * alpha + (1.0 - y) * (1.0 - alpha)

    t = jnp.abs(y - pred_prob)
    if gamma == 1.5:
        modulating_factor = t * jnp.sqrt(t)      # t**1.5 with one EUP op
    elif gamma == 2.0:
        modulating_factor = t * t
    elif gamma == 1.0:
        modulating_factor = t
    else:
        modulating_factor = jnp.power(t, gamma)  # generic fallback

    loss = bce * alpha_factor * modulating_factor

    def fold(v):
        # (rows_per_block, 128) -> (acc_rows, 128): acc_rows//8 independent
        # vreg-add chains, so the reduce doesn't expose VALU latency.
        return v.reshape(rows_per_block // acc_rows, acc_rows, LANES).sum(axis=0)

    b = p * steps + j                                   # global block index
    has_partial = last_block_rows != rows_per_block     # static Python bool

    if has_partial:
        @pl.when(b < num_blocks - 1)                    # full blocks: no mask
        def _():
            acc_ref[...] += fold(loss)

        @pl.when(b == num_blocks - 1)                   # single partial block
        def _():
            # Rows beyond the array bound inside this edge block hold
            # unspecified data; select (not multiply) them away.
            row_ids = lax.broadcasted_iota(jnp.int32, loss.shape, 0)
            acc_ref[...] += fold(jnp.where(row_ids < last_block_rows, loss, 0.0))
        # b >= num_blocks (phantom load-balancing step): nothing accumulated.
    elif has_phantom:
        @pl.when(b < num_blocks)
        def _():
            acc_ref[...] += fold(loss)
    else:
        acc_ref[...] += fold(loss)

    @pl.when(j == pl.num_programs(1) - 1)
    def _():
        out_ref[...] = acc_ref[...]


def _round_up(x, m):
    return -(-x // m) * m


def _min_sublanes(dtype):
    return {4: 8, 2: 16, 1: 32}.get(jnp.dtype(dtype).itemsize, 8)


def _num_parallel_parts():
    """2 grid partitions on multi-TensorCore devices (v4/v5p megacore, v7x);
    1 on single-TensorCore parts (v2/v3 per-core devices, v5e, v6e)."""
    try:
        kind = jax.devices()[0].device_kind.lower()
    except Exception:
        return 1
    if any(tag in kind for tag in ("lite", "v5e", "v6e", "v2", "v3")):
        return 1
    return 2


def _block_budget(itemsize):
    """Returns (max rows per block, scoped vmem limit), sized from VMEM."""
    try:
        vmem = pltpu.get_tpu_info().vmem_capacity_bytes
    except Exception:
        vmem = 64 << 20                          # conservative (v7x-sized)
    if vmem >= (96 << 20):                       # v5e / v6e: 128 MiB VMEM
        block_bytes, vmem_limit = 8 << 20, 64 << 20
    else:                                        # v7x class: 64 MiB VMEM
        block_bytes, vmem_limit = 4 << 20, 32 << 20
    max_rows = max(64, (block_bytes // (LANES * itemsize)) // 64 * 64)
    return max_rows, vmem_limit


def qfocal_loss(pred, true, gamma=GAMMA, alpha=ALPHA, reduction="mean",
                max_rows_per_block=None, num_parts=None):
    assert pred.shape == true.shape
    total = int(pred.size)
    assert total > 0

    # Flatten row-major; pad only to the next multiple of 128 lanes.  When
    # total is already lane-aligned this is a zero-copy reshape (no extra HBM
    # pass); ragged totals pad at most 127 zero elements.
    rows = -(-total // LANES)
    pad = rows * LANES - total

    def _prep(a):
        flat = a.reshape(-1)
        if pad:
            flat = jnp.pad(flat, (0, pad))
        return flat.reshape(rows, LANES)

    pred2d = _prep(pred)
    true2d = _prep(true)

    itemsize = max(jnp.dtype(pred.dtype).itemsize, jnp.dtype(true.dtype).itemsize)
    sub = max(_min_sublanes(pred.dtype), _min_sublanes(true.dtype))
    auto_max_rows, vmem_limit = _block_budget(itemsize)
    if max_rows_per_block is None:
        max_rows_per_block = auto_max_rows
    max_rows_per_block = _round_up(max_rows_per_block, sub)

    rows_per_block = min(max_rows_per_block, _round_up(rows, sub))
    num_blocks = -(-rows // rows_per_block)
    last_block_rows = rows - (num_blocks - 1) * rows_per_block

    if num_parts is None:
        num_parts = _num_parallel_parts()
    num_parts = max(1, min(num_parts, num_blocks))
    steps = -(-num_blocks // num_parts)          # part 0 gets ceil, part 1 floor
    has_phantom = num_parts * steps > num_blocks

    if rows_per_block % 64 == 0:
        acc_rows = 64
    elif rows_per_block % 16 == 0:
        acc_rows = 16
    else:
        acc_rows = 8

    kernel = functools.partial(
        _qfocal_sum_kernel, gamma=gamma, alpha=alpha, steps=steps,
        num_blocks=num_blocks, rows_per_block=rows_per_block,
        last_block_rows=last_block_rows, acc_rows=acc_rows,
        has_phantom=has_phantom)

    # Clamped index_map: a phantom load-balancing step re-points at the last
    # valid block (its accumulation is skipped in-kernel with pl.when).
    def block_index(p, j):
        return (jnp.minimum(p * steps + j, num_blocks - 1), 0)

    in_spec = pl.BlockSpec((rows_per_block, LANES), block_index)

    partial_sums = pl.pallas_call(
        kernel,
        out_shape=jax.ShapeDtypeStruct((num_parts * acc_rows, LANES), jnp.float32),
        grid_spec=pltpu.PrefetchScalarGridSpec(
            num_scalar_prefetch=0,
            grid=(num_parts, steps),
            in_specs=[in_spec, in_spec],
            out_specs=pl.BlockSpec((acc_rows, LANES), lambda p, j: (p, 0)),
            scratch_shapes=[pltpu.VMEM((acc_rows, LANES), jnp.float32)],
        ),
        compiler_params=pltpu.CompilerParams(
            dimension_semantics=("parallel", "arbitrary"),
            vmem_limit_bytes=vmem_limit,
        ),
    )(pred2d, true2d)

    loss_sum = jnp.sum(partial_sums)
    if pad:
        # Zero-padded elements (pred=0, true=0) each contribute the constant
        # loss log(2) * (1 - alpha) * 0.5**gamma; subtract instead of masking.
        loss_sum = loss_sum - pad * (math.log(2.0) * (1.0 - alpha) * 0.5 ** gamma)

    if reduction == "mean":
        return loss_sum / total
    elif reduction == "sum":
        return loss_sum
    else:
        # TODO(synk): reduction='none' (full elementwise output) would need a
        # separate elementwise kernel; the wrapped BCEWithLogitsLoss default is 'mean'.
        raise NotImplementedError("reduction='none' not implemented")


def _qfocal_ref(pred, true, gamma=GAMMA, alpha=ALPHA):
    x = pred.astype(jnp.float32)
    y = true.astype(jnp.float32)
    bce = jnp.maximum(x, 0.0) - x * y + jnp.log1p(jnp.exp(-jnp.abs(x)))
    p = jax.nn.sigmoid(x)
    loss = bce * (y * alpha + (1.0 - y) * (1.0 - alpha)) * jnp.abs(y - p) ** gamma
    return jnp.mean(loss)


if __name__ == "__main__":
    key = jax.random.PRNGKey(0)
    keys = jax.random.split(key, 10)

    def check(pred, true, **kw):
        out = jax.block_until_ready(qfocal_loss(pred, true, **kw))
        ref = _qfocal_ref(pred, true)
        assert jnp.allclose(out, ref, rtol=1e-5, atol=1e-6), (kw, out, ref)

    # 1) NCHW logits/targets as the PyTorch module receives them; lane-aligned
    #    total -> zero-copy single-block path.
    p1 = jax.random.normal(keys[0], (2, 4, 16, 16), jnp.float32)
    t1 = jax.random.uniform(keys[1], (2, 4, 16, 16), jnp.float32)
    check(p1, t1)

    # 2) Ragged total (945 elements): lane pad + constant-correction path.
    p2 = jax.random.normal(keys[2], (3, 5, 7, 9), jnp.float32)
    t2 = jax.random.uniform(keys[3], (3, 5, 7, 9), jnp.float32)
    check(p2, t2)

    # 3) Row count not a multiple of the block: partial edge block, pl.when-gated
    #    row mask on the single last block only.
    p3 = jax.random.normal(keys[4], (2, 832), jnp.float32)   # 13 rows of 128
    t3 = jax.random.uniform(keys[5], (2, 832), jnp.float32)
    check(p3, t3)

    # 4) Forced small blocks + 2 partitions with an odd block count: exercises
    #    the load-balanced phantom step, the partial block and the 2-way grid.
    p4 = jax.random.normal(keys[6], (5, 512), jnp.float32)   # 20 rows of 128
    t4 = jax.random.uniform(keys[7], (5, 512), jnp.float32)
    check(p4, t4, max_rows_per_block=8, num_parts=2)

    # 5) bf16 inputs stay bf16 on the wire (half HBM bytes); math stays f32.
    p5 = jax.random.normal(keys[8], (2, 4, 16, 16), jnp.float32).astype(jnp.bfloat16)
    t5 = jax.random.uniform(keys[9], (2, 4, 16, 16), jnp.float32).astype(jnp.bfloat16)
    check(p5, t5)

    # 6) reduction='sum'
    out6 = jax.block_until_ready(qfocal_loss(p1, t1, reduction="sum"))
    ref6 = _qfocal_ref(p1, t1) * p1.size
    assert jnp.allclose(out6, ref6, rtol=1e-5, atol=1e-5), (out6, ref6)

    print("KERNEL_OK")
</pallas_src>

<mosaic_0001>
module attributes {stable_mosaic.version = 11 : i64} {
  func.func @_qfocal_sum_kernel(%arg0: i32, %arg1: i32, %arg2: memref<16x128xf32, #tpu.memory_space<vmem>>, %arg3: memref<16x128xf32, #tpu.memory_space<vmem>>, %arg4: memref<16x128xf32, #tpu.memory_space<vmem>>, %arg5: memref<16x128xf32, #tpu.memory_space<vmem>>) attributes {dimension_semantics = [#tpu.dimension_semantics<parallel>, #tpu.dimension_semantics<arbitrary>], iteration_bounds = array<i64: 1, 1>, scalar_prefetch = 0 : i64, scratch_operands = 1 : i64, tpu.core_type = #tpu.core_type<tc>, window_params = [{transform_indices = @transform_0, window_bounds = array<i64: 16, 128>}, {transform_indices = @transform_1, window_bounds = array<i64: 16, 128>}, {transform_indices = @transform_2, window_bounds = array<i64: 16, 128>}]} {
    %c0_i32 = arith.constant 0 : i32
    %0 = arith.cmpi eq, %arg1, %c0_i32 : i32
    %1 = arith.extui %0 : i1 to i32
    %c0_i32_0 = arith.constant 0 : i32
    %2 = arith.cmpi ne, %1, %c0_i32_0 : i32
    scf.if %2 {
      %cst_18 = arith.constant 0.000000e+00 : f32
      %44 = vector.broadcast %cst_18 : f32 to vector<16x128xf32>
      %c0_19 = arith.constant 0 : index
      %c0_20 = arith.constant 0 : index
      %45 = vector.load %arg5[%c0_19, %c0_20] : memref<16x128xf32, #tpu.memory_space<vmem>>, vector<16x128xf32>
      tpu.vector_store %arg5[%c0_19, %c0_20], %44 {strides = array<i32>} : memref<16x128xf32, #tpu.memory_space<vmem>>, vector<16x128xf32>,
    } else {
    }
    %c0 = arith.constant 0 : index
    %c0_1 = arith.constant 0 : index
    %3 = vector.load %arg2[%c0, %c0_1] : memref<16x128xf32, #tpu.memory_space<vmem>>, vector<16x128xf32>
    %c0_2 = arith.constant 0 : index
    %c0_3 = arith.constant 0 : index
    %4 = vector.load %arg3[%c0_2, %c0_3] : memref<16x128xf32, #tpu.memory_space<vmem>>, vector<16x128xf32>
    %5 = math.absf %3 : vector<16x128xf32>
    %cst = arith.constant 0.000000e+00 : f32
    %6 = vector.broadcast %cst : f32 to vector<16x128xf32>
    %7 = arith.subf %6, %5 : vector<16x128xf32>
    %8 = math.exp %7 : vector<16x128xf32>
    %cst_4 = arith.constant 0.000000e+00 : f32
    %9 = vector.broadcast %cst_4 : f32 to vector<16x128xf32>
    %10 = arith.maximumf %3, %9 : vector<16x128xf32>
    %11 = arith.mulf %3, %4 : vector<16x128xf32>
    %12 = arith.subf %10, %11 : vector<16x128xf32>
    %13 = math.log1p %8 : vector<16x128xf32>
    %14 = arith.addf %12, %13 : vector<16x128xf32>
    %cst_5 = arith.constant 1.000000e+00 : f32
    %15 = vector.broadcast %cst_5 : f32 to vector<16x128xf32>
    %16 = arith.addf %15, %8 : vector<16x128xf32>
    %cst_6 = arith.constant 1.000000e+00 : f32
    %17 = vector.broadcast %cst_6 : f32 to vector<16x128xf32>
    %18 = arith.divf %17, %16 : vector<16x128xf32>
    %cst_7 = arith.constant 0.000000e+00 : f32
    %19 = vector.broadcast %cst_7 : f32 to vector<16x128xf32>
    %20 = arith.cmpf oge, %3, %19 : vector<16x128xf32>
    %21 = arith.mulf %8, %18 : vector<16x128xf32>
    %22 = arith.select %20, %18, %21 : vector<16x128xi1>, vector<16x128xf32>
    %cst_8 = arith.constant 2.500000e-01 : f32
    %23 = vector.broadcast %cst_8 : f32 to vector<16x128xf32>
    %24 = arith.mulf %4, %23 : vector<16x128xf32>
    %cst_9 = arith.constant 1.000000e+00 : f32
    %25 = vector.broadcast %cst_9 : f32 to vector<16x128xf32>
    %26 = arith.subf %25, %4 : vector<16x128xf32>
    %cst_10 = arith.constant 7.500000e-01 : f32
    %27 = vector.broadcast %cst_10 : f32 to vector<16x128xf32>
    %28 = arith.mulf %26, %27 : vector<16x128xf32>
    %29 = arith.addf %24, %28 : vector<16x128xf32>
    %30 = arith.subf %4, %22 : vector<16x128xf32>
    %31 = math.absf %30 : vector<16x128xf32>
    %32 = math.sqrt %31 : vector<16x128xf32>
    %33 = arith.mulf %31, %32 : vector<16x128xf32>
    %34 = arith.mulf %14, %29 : vector<16x128xf32>
    %35 = arith.mulf %34, %33 : vector<16x128xf32>
    %c0_11 = arith.constant 0 : index
    %c0_12 = arith.constant 0 : index
    %36 = vector.load %arg5[%c0_11, %c0_12] : memref<16x128xf32, #tpu.memory_space<vmem>>, vector<16x128xf32>
    %37 = vector.shape_cast %35 : vector<16x128xf32> to vector<1x16x128xf32>
    %cst_13 = arith.constant dense<0.000000e+00> : vector<16x128xf32>
    %38 = vector.multi_reduction <add>, %37, %cst_13 [0] : vector<1x16x128xf32> to vector<16x128xf32>
    %39 = arith.addf %36, %38 : vector<16x128xf32>
    %c0_14 = arith.constant 0 : index
    %c0_15 = arith.constant 0 : index
    %40 = vector.load %arg5[%c0_14, %c0_15] : memref<16x128xf32, #tpu.memory_space<vmem>>, vector<16x128xf32>
    tpu.vector_store %arg5[%c0_14, %c0_15], %39 {strides = array<i32>} : memref<16x128xf32, #tpu.memory_space<vmem>>, vector<16x128xf32>,
    %c0_i32_16 = arith.constant 0 : i32
    %41 = arith.cmpi eq, %arg1, %c0_i32_16 : i32
    %42 = arith.extui %41 : i1 to i32
    %c0_i32_17 = arith.constant 0 : i32
    %43 = arith.cmpi ne, %42, %c0_i32_17 : i32
    scf.if %43 {
      %c0_18 = arith.constant 0 : index
      %c0_19 = arith.constant 0 : index
      %44 = vector.load %arg5[%c0_18, %c0_19] : memref<16x128xf32, #tpu.memory_space<vmem>>, vector<16x128xf32>
      %c0_20 = arith.constant 0 : index
      %c0_21 = arith.constant 0 : index
      %45 = vector.load %arg4[%c0_20, %c0_21] : memref<16x128xf32, #tpu.memory_space<vmem>>, vector<16x128xf32>
      tpu.vector_store %arg4[%c0_20, %c0_21], %44 {strides = array<i32>} : memref<16x128xf32, #tpu.memory_space<vmem>>, vector<16x128xf32>,
    } else {
    }
    return
  }
  func.func @transform_0(%arg0: i32, %arg1: i32) -> (i32, i32) {
    %c1_i32 = arith.constant 1 : i32
    %0 = arith.muli %arg0, %c1_i32 : i32
    %1 = arith.addi %0, %arg1 : i32
    %c0_i32 = arith.constant 0 : i32
    %2 = arith.minsi %1, %c0_i32 : i32
    %c0_i32_0 = arith.constant 0 : i32
    %c0_i32_1 = arith.constant 0 : i32
    return %2, %c0_i32_0 : i32, i32
  }
  func.func @transform_1(%arg0: i32, %arg1: i32) -> (i32, i32) {
    %c1_i32 = arith.constant 1 : i32
    %0 = arith.muli %arg0, %c1_i32 : i32
    %1 = arith.addi %0, %arg1 : i32
    %c0_i32 = arith.constant 0 : i32
    %2 = arith.minsi %1, %c0_i32 : i32
    %c0_i32_0 = arith.constant 0 : i32
    %c0_i32_1 = arith.constant 0 : i32
    return %2, %c0_i32_0 : i32, i32
  }
  func.func @transform_2(%arg0: i32, %arg1: i32) -> (i32, i32) {
    %c0_i32 = arith.constant 0 : i32
    %c0_i32_0 = arith.constant 0 : i32
    return %arg0, %c0_i32 : i32, i32
  }
}

</mosaic_0001>

<llo_original>
// kernel: tpu_custom_call.1
$region0: #{tpu_custom_call.1}
  #allocation0 [shape = 'u32[]', space=smem, size = 0x4, offset = 0x4, fixed_abs, tag = 'smem constant byte address 0x4 - core index']
  #allocation1 [shape = 'u32[72,128]{1,0:T(1,128)}', space=vmem, size = 0x9000, scoped, tag = 'internal scratch']
  #allocation2 [shape = 'f32[16,128]{1,0:T(8,128)}', space=vmem, size = 0x2000, scoped, tag = 'scratch operand']
  %s0 = inlined_call_operand.hbm [shape: f32[16,128], index: 0, kind: input, shape index: {}]
  %s1 = inlined_call_operand.hbm [shape: f32[16,128], index: 1, kind: input, shape index: {}]
  %s2 = inlined_call_operand.hbm [shape: f32[16,128], index: 2, kind: output, shape index: {}]
  %s3 = sld [smem:[#allocation0]]
  $region34: #{tpu_custom_call.1} parent=0
    _
  %s5 = ssub.s32 1, %s3
  %s6 = scalar_select 0, %s5, %s3
  $region1: #{tpu_custom_call.1} parent=0
    #allocation3 [shape = 'u8[8192]{0}', space=vmem, size = 0x2000, scoped, tag = 'input window, operand 0, single buffered']
    #allocation4 [shape = 's32[1]{0}', space=sflag, size = 0x4, scoped, tag = 'scoped memory for tpu_custom_call.1']
    #allocation5 [shape = 's32[1]{0}', space=sflag, size = 0x4, scoped, tag = 'scoped memory for tpu_custom_call.1']
    #allocation6 [shape = 'u8[8192]{0}', space=vmem, size = 0x2000, scoped, tag = 'input window, operand 1, single buffered']
    #allocation7 [shape = 's32[1]{0}', space=sflag, size = 0x4, scoped, tag = 'scoped memory for tpu_custom_call.1']
    #allocation8 [shape = 'u8[8192]{0}', space=vmem, size = 0x2000, scoped, tag = 'output window, operand 0, single buffered']
    %7 = vsyncpa [#allocation4], 0
    %8 = vsyncpa [#allocation7], 0
    %9 = vsyncpa [#allocation5], 0
    // Predicated region
    $region2: #{tpu_custom_call.1} parent=1 // pred_check
      _
    $region3: #{tpu_custom_call.1} parent=1 // pred_check_branch
      %11 = sbr.rel (0) target = $region5
    $region4: #{tpu_custom_call.1} parent=1 // pred_region
      %s12 = sadd.s32 0, 0
      %p13 = scmp.lt.s32.totalorder %s12, 0
      %s14 = scalar_select %p13, %s12, 0
      %s15 = smul.u32 2, %s14
      %17 = vsyncadd [#allocation4], 0
      %s18 = smul.addr %s15, 8
      %s19 = scalar_lea.hbm %s0, %s18
      %s20 = sshll.u32 %s19, 4
      %s21 = int_to_ptr.hbm [resolvable:$true] %s20
      %s22 = sshll.u32 [#allocation3], 4
      %s23 = int_to_ptr.vmem [resolvable:$true] %s22
      %28 = dma.hbm_to_vmem [thread:$0]  %s21, 256, %s23, [#allocation4], 128, 128, 8
    $region5: #{tpu_custom_call.1} parent=1 // pred_fallthru
      _
    // Predicated region
    $region6: #{tpu_custom_call.1} parent=1 // pred_check
      _
    $region7: #{tpu_custom_call.1} parent=1 // pred_check_branch
      %30 = sbr.rel (0) target = $region9
    $region8: #{tpu_custom_call.1} parent=1 // pred_region
      %s31 = sadd.s32 0, 0
      %p32 = scmp.lt.s32.totalorder %s31, 0
      %s33 = scalar_select %p32, %s31, 0
      %s34 = smul.u32 2, %s33
      %36 = vsyncadd [#allocation7], 0
      %s37 = smul.addr %s34, 8
      %s38 = scalar_lea.hbm %s1, %s37
      %s39 = sshll.u32 %s38, 4
      %s40 = int_to_ptr.hbm [resolvable:$true] %s39
      %s41 = sshll.u32 [#allocation6], 4
      %s42 = int_to_ptr.vmem [resolvable:$true] %s41
      %47 = dma.hbm_to_vmem [thread:$0]  %s40, 256, %s42, [#allocation7], 128, 128, 8
    $region9: #{tpu_custom_call.1} parent=1 // pred_fallthru
      _
    // Predicated region
    $region10: #{tpu_custom_call.1} parent=1 // pred_check
      _
    $region11: #{tpu_custom_call.1} parent=1 // pred_check_branch
      %49 = sbr.rel (0) target = $region13
    $region12: #{tpu_custom_call.1} parent=1 // pred_region
      %51 = dma.done [#allocation4], 256
    $region13: #{tpu_custom_call.1} parent=1 // pred_fallthru
      _
    // Predicated region
    $region14: #{tpu_custom_call.1} parent=1 // pred_check
      _
    $region15: #{tpu_custom_call.1} parent=1 // pred_check_branch
      %53 = sbr.rel (0) target = $region17
    $region16: #{tpu_custom_call.1} parent=1 // pred_region
      %55 = dma.done [#allocation7], 256
    $region17: #{tpu_custom_call.1} parent=1 // pred_fallthru
      _
    %s56 = sadd.s32 0, 0
    %p57 = scmp.lt.s32.totalorder %s56, 0
    %s58 = scalar_select %p57, %s56, 0
    %s59 = smul.u32 2, %s58
    %s60 = sadd.s32 0, 0
    %p61 = scmp.lt.s32.totalorder %s60, 0
    %s62 = scalar_select %p61, %s60, 0
    %s63 = smul.u32 2, %s62
    %p64 = scmp.eq.s32.totalorder 0, 0
    // Predicated region
    $region18: #{tpu_custom_call.1} parent=1 // pred_check
      %p65 = pneg %p64
    $region19: #{tpu_custom_call.1} parent=1 // pred_check_branch
      %67 = sbr.rel (%p65) target = $region21
    $region20: #{tpu_custom_call.1} parent=1 // pred_region
      %68 = vst [vmem:[#allocation2] sm:$0xff] 0.0
      %69 = vst [vmem:[#allocation2 + $0x8] sm:$0xff] 0.0
    $region21: #{tpu_custom_call.1} parent=1 // pred_fallthru
      _
    %v70 = vld [vmem:[#allocation3] sm:$0xff]
    %v71 = vld [vmem:[#allocation3 + $0x8] sm:$0xff]
    %v72 = vld [vmem:[#allocation6] sm:$0xff]
    %v73 = vld [vmem:[#allocation6 + $0x8] sm:$0xff]
    %v74 = vand.u32 2147483647, %v70
    %v75 = vand.u32 2147483647, %v71
    %v76 = vsub.f32 0.0, %v74
    %v77 = vsub.f32 0.0, %v75
    %v78 = vmul.f32 %v76, 1.442695
    %v79 = vpow.pop %v78
    %v80 = vmul.f32 %v77, 1.442695
    %v81 = vpow.pop %v80
    %v82 = vmax.f32 %v70, 0.0
    %v83 = vmax.f32 %v71, 0.0
    %v84 = vmul.f32 %v70, %v72
    %v85 = vmul.f32 %v71, %v73
    %v86 = vsub.f32 %v82, %v84
    %v87 = vsub.f32 %v83, %v85
    %v88 = vadd.f32 %v79, 1.0
    %v89 = vlog2.pop %v88
    %v90 = vmul.f32 %v89, 0.6931472
    %v91 = vmul.f32 -0.5, %v79
    %v92 = vadd.f32 %v91, 1.0
    %v93 = vmul.f32 %v92, %v79
    %v94 = vand.u32 2147483647, %v79
    %vm95 = vcmp.lt.f32.partialorder %v94, 0.0004427343
    %v96 = vsel %vm95, %v93, %v90
    %v97 = vadd.f32 %v81, 1.0
    %v98 = vlog2.pop %v97
    %v99 = vmul.f32 %v98, 0.6931472
    %v100 = vmul.f32 -0.5, %v81
    %v101 = vadd.f32 %v100, 1.0
    %v102 = vmul.f32 %v101, %v81
    %v103 = vand.u32 2147483647, %v81
    %vm104 = vcmp.lt.f32.partialorder %v103, 0.0004427343
    %v105 = vsel %vm104, %v102, %v99
    %v106 = vadd.f32 %v86, %v96
    %v107 = vadd.f32 %v87, %v105
    %v108 = vadd.f32 %v79, 1.0
    %v109 = vadd.f32 %v81, 1.0
    %v110 = vrcp.pop %v108
    %v111 = vmul.f32 %v108, %v110
    %v112 = vsub.f32 1.0, %v111
    %v113 = vmul.f32 %v110, %v112
    %v114 = vadd.f32 %v110, %v113
    %vm115 = vweird.f32 %v108
    %vm116 = vweird.f32 %v110
    %vm117 = vmor %vm115, %vm116
    %v118 = vsel %vm117, %v110, %v114
    %v119 = vand.u32 2147483647, %v108
    %vm120 = vcmp.eq.f32.partialorder %v119, 8.507059e+37
    %v121 = vand.u32 %v108, 2147483648
    %v122 = vor.u32 1.1754944e-38, %v121
    %v123 = vsel %vm120, %v122, %v118
    %v124 = vmul.f32 1.0, %v123
    %v125 = vrcp.pop %v109
    %v126 = vmul.f32 %v109, %v125
    %v127 = vsub.f32 1.0, %v126
    %v128 = vmul.f32 %v125, %v127
    %v129 = vadd.f32 %v125, %v128
    %vm130 = vweird.f32 %v109
    %vm131 = vweird.f32 %v125
    %vm132 = vmor %vm130, %vm131
    %v133 = vsel %vm132, %v125, %v129
    %v134 = vand.u32 2147483647, %v109
    %vm135 = vcmp.eq.f32.partialorder %v134, 8.507059e+37
    %v136 = vand.u32 %v109, 2147483648
    %v137 = vor.u32 1.1754944e-38, %v136
    %v138 = vsel %vm135, %v137, %v133
    %v139 = vmul.f32 1.0, %v138
    %vm140 = vcmp.ge.f32.partialorder %v70, 0.0
    %vm141 = vcmp.ge.f32.partialorder %v71, 0.0
    %v142 = vmul.f32 %v79, %v124
    %v143 = vmul.f32 %v81, %v139
    %v144 = vsel %vm140, %v124, %v142
    %v145 = vsel %vm141, %v139, %v143
    %v146 = vmul.f32 %v72, 0.25
    %v147 = vmul.f32 %v73, 0.25
    %v148 = vsub.f32 1.0, %v72
    %v149 = vsub.f32 1.0, %v73
    %v150 = vmul.f32 %v148, 0.75
    %v151 = vmul.f32 %v149, 0.75
    %v152 = vadd.f32 %v146, %v150
    %v153 = vadd.f32 %v147, %v151
    %v154 = vsub.f32 %v72, %v144
    %v155 = vsub.f32 %v73, %v145
    %v156 = vand.u32 2147483647, %v154
    %v157 = vand.u32 2147483647, %v155
    %v158 = vrsqrt.pop %v156
    %v159 = vmul.f32 %v158, %v156
    %v160 = vmul.f32 %v159, %v158
    %v161 = vmul.f32 0.5, %v160
    %v162 = vsub.f32 1.5, %v161
    %v163 = vmul.f32 %v158, %v162
    %v164 = vmul.f32 %v156, %v163
    %vm165 = vcmp.eq.f32.partialorder %v156, inf
    %v166 = vsel %vm165, %v156, %v164
    %vm167 = vcmp.eq.f32.partialorder %v156, 0.0
    %v168 = vand.u32 %v156, 2147483648
    %v169 = vsel %vm167, %v168, %v166
    %v170 = vrsqrt.pop %v157
    %v171 = vmul.f32 %v170, %v157
    %v172 = vmul.f32 %v171, %v170
    %v173 = vmul.f32 0.5, %v172
    %v174 = vsub.f32 1.5, %v173
    %v175 = vmul.f32 %v170, %v174
    %v176 = vmul.f32 %v157, %v175
    %vm177 = vcmp.eq.f32.partialorder %v157, inf
    %v178 = vsel %vm177, %v157, %v176
    %vm179 = vcmp.eq.f32.partialorder %v157, 0.0
    %v180 = vand.u32 %v157, 2147483648
    %v181 = vsel %vm179, %v180, %v178
    %v182 = vmul.f32 %v156, %v169
    %v183 = vmul.f32 %v157, %v181
    %v184 = vmul.f32 %v106, %v152
    %v185 = vmul.f32 %v107, %v153
    %v186 = vmul.f32 %v184, %v182
    %v187 = vmul.f32 %v185, %v183
    %v188 = vld [vmem:[#allocation2] sm:$0xff]
    %v189 = vld [vmem:[#allocation2 + $0x8] sm:$0xff]
    %v190 = vadd.f32 %v186, 0.0
    %v191 = vadd.f32 %v187, 0.0
    %v192 = vadd.f32 %v188, %v190
    %v193 = vadd.f32 %v189, %v191
    %194 = vst [vmem:[#allocation2] sm:$0xff] %v192
    %195 = vst [vmem:[#allocation2 + $0x8] sm:$0xff] %v193
    // Predicated region
    $region22: #{tpu_custom_call.1} parent=1 // pred_check
      %p196 = pneg %p64
    $region23: #{tpu_custom_call.1} parent=1 // pred_check_branch
      %198 = sbr.rel (%p196) target = $region25
    $region24: #{tpu_custom_call.1} parent=1 // pred_region
      %v199 = vld [vmem:[#allocation2] sm:$0xff]
      %v200 = vld [vmem:[#allocation2 + $0x8] sm:$0xff]
      %201 = vst [vmem:[#allocation8] sm:$0xff] %v199
      %202 = vst [vmem:[#allocation8 + $0x8] sm:$0xff] %v200
    $region25: #{tpu_custom_call.1} parent=1 // pred_fallthru
      _
    // Predicated region
    $region26: #{tpu_custom_call.1} parent=1 // pred_check
      _
    $region27: #{tpu_custom_call.1} parent=1 // pred_check_branch
      %204 = sbr.rel (0) target = $region29
    $region28: #{tpu_custom_call.1} parent=1 // pred_region
      %206 = vsyncadd [#allocation5], 0
      %s207 = sshll.u32 [#allocation8], 4
      %s208 = int_to_ptr.vmem [resolvable:$true] %s207
      %s209 = sshll.u32 %s2, 4
      %s210 = int_to_ptr.hbm [resolvable:$true] %s209
      %215 = dma.vmem_to_hbm [thread:$0]  %s208, 256, %s210, [#allocation5], 128, 128, 8
    $region29: #{tpu_custom_call.1} parent=1 // pred_fallthru
      _
    // Predicated region
    $region30: #{tpu_custom_call.1} parent=1 // pred_check
      _
    $region31: #{tpu_custom_call.1} parent=1 // pred_check_branch
      %217 = sbr.rel (0) target = $region33
    $region32: #{tpu_custom_call.1} parent=1 // pred_region
      %219 = dma.done [#allocation5], 256
    $region33: #{tpu_custom_call.1} parent=1 // pred_fallthru
      _
    %220 = vsyncpa [#allocation4], 1
    %221 = vsyncpa [#allocation7], 1
    %222 = vsyncpa [#allocation5], 1

</llo_original>
